<compile_context>
chip_gen: v6e
topology: v6e:2x2x1
jax: 0.10.0
libtpu: 0.0.40
codegen_flags: <defaults>
</compile_context>

<pallas_src>
import functools

import jax
import jax.numpy as jnp
from jax.experimental import pallas as pl
from jax.experimental.pallas import tpu as pltpu

CIN = 4
HIDDEN = 32
KSIZE = 3


# ----------------------------- fused Pallas kernel (whole forward pass) -----------------------------
def _fused_predictor_kernel(cols_ref, w_enc_ref, b_enc_ref,
                            w_ix_ref, w_ie_ref, b_int_ref,
                            w_fx_ref, w_fi_ref, b_for_ref,
                            o_ref, *, cin, center):
    # cols_ref: (Kp, M) bf16 -- im2col'd 3x3 patches, channels-first, M = H*W lane-dense.
    cols = cols_ref[...]
    # Raw input channels == centre tap of the 3x3 patch stack (rows [center, center+cin)).
    x_t = cols[center:center + cin, :]                                      # (Cin, M) bf16

    # encoder: 3x3 conv (+bias, ReLU) as a single MXU matmul, f32 accumulation.
    enc = jnp.dot(w_enc_ref[...], cols, preferred_element_type=jnp.float32)
    enc = jnp.maximum(enc + b_enc_ref[...], 0.0).astype(jnp.bfloat16)       # (H, M)

    # interactor: concat([x, enc]) @ W == x @ W[:Cin] + enc @ W[Cin:]  (weight split, no concat).
    inter = (jnp.dot(w_ix_ref[...], x_t, preferred_element_type=jnp.float32)
             + jnp.dot(w_ie_ref[...], enc, preferred_element_type=jnp.float32))
    inter = jnp.maximum(inter + b_int_ref[...], 0.0).astype(jnp.bfloat16)   # (H, M)

    # forecaster (linear head), stored channels-first -> lane-dense (last dim = M >= 128).
    out = (jnp.dot(w_fx_ref[...], x_t, preferred_element_type=jnp.float32)
           + jnp.dot(w_fi_ref[...], inter, preferred_element_type=jnp.float32)
           + b_for_ref[...])
    o_ref[...] = out.astype(o_ref.dtype)                                    # (Cout, M)


# ----------------------------- Predictor forward -----------------------------
@jax.jit
def predictor_forward(params, batch_nchw):
    """batch_nchw: (N, Cin, H, W) f32 -> preds: (N, Cin, H, W) f32 (NCHW, matching PyTorch)."""
    n, c, h, w = batch_nchw.shape
    m = h * w
    kp = params["w_enc"].shape[1]          # padded contraction dim (multiple of 8)
    hidden = params["w_enc"].shape[0]
    cout = params["w_fx"].shape[0]
    center = (KSIZE * KSIZE // 2) * c      # row offset of the centre (dy=1, dx=1) tap

    # Tiny channels-first im2col on the XLA side (pad + 9 slices + concat fuse into one producer);
    # it feeds the fused kernel directly -- enc/inter never hit HBM.
    xp = jnp.pad(batch_nchw, ((0, 0), (0, 0), (1, 1), (1, 1)))
    patches = [xp[:, :, dy:dy + h, dx:dx + w] for dy in range(KSIZE) for dx in range(KSIZE)]
    cols = jnp.concatenate(patches, axis=1).reshape(n, KSIZE * KSIZE * c, m)
    cols = jnp.pad(cols, ((0, 0), (0, kp - KSIZE * KSIZE * c), (0, 0))).astype(jnp.bfloat16)

    out = pl.pallas_call(
        functools.partial(_fused_predictor_kernel, cin=c, center=center),
        out_shape=jax.ShapeDtypeStruct((n, cout, m), jnp.float32),
        grid=(n,),                         # 2 parallel steps -> both TensorCores on v7x
        in_specs=[
            pl.BlockSpec((None, kp, m), lambda i: (i, 0, 0)),       # cols (per-image)
            pl.BlockSpec((hidden, kp), lambda i: (0, 0)),           # w_enc^T (padded K)
            pl.BlockSpec((hidden, 1), lambda i: (0, 0)),            # b_enc
            pl.BlockSpec((hidden, c), lambda i: (0, 0)),            # w_int[:Cin]^T
            pl.BlockSpec((hidden, hidden), lambda i: (0, 0)),       # w_int[Cin:]^T
            pl.BlockSpec((hidden, 1), lambda i: (0, 0)),            # b_int
            pl.BlockSpec((cout, c), lambda i: (0, 0)),              # w_for[:Cin]^T
            pl.BlockSpec((cout, hidden), lambda i: (0, 0)),         # w_for[Cin:]^T
            pl.BlockSpec((cout, 1), lambda i: (0, 0)),              # b_for
        ],
        out_specs=pl.BlockSpec((None, cout, m), lambda i: (i, 0, 0)),
        compiler_params=pltpu.CompilerParams(dimension_semantics=("parallel",)),
    )(cols, params["w_enc"], params["b_enc"],
      params["w_ix"], params["w_ie"], params["b_int"],
      params["w_fx"], params["w_fi"], params["b_for"])

    return out.reshape(n, cout, h, w)      # already NCHW -- no transpose needed


# ----------------------------- parameters -----------------------------
def init_params(key, cin=CIN, hidden=HIDDEN):
    """Logical (PyTorch-like) f32 parameters."""
    k0, k1, k2 = jax.random.split(key, 3)
    scale = 0.1
    return {
        "enc_w": scale * jax.random.normal(k0, (KSIZE, KSIZE, cin, hidden), jnp.float32),  # HWIO
        "enc_b": jnp.zeros((hidden,), jnp.float32),
        "int_w": scale * jax.random.normal(k1, (cin + hidden, hidden), jnp.float32),
        "int_b": jnp.zeros((hidden,), jnp.float32),
        "for_w": scale * jax.random.normal(k2, (cin + hidden, cin), jnp.float32),
        "for_b": jnp.zeros((cin,), jnp.float32),
    }


def prepare_params(raw, cin=CIN):
    """Kernel-ready params: transposed (channels-first), concat-split, K padded to 8, bf16 weights."""
    kh, kw, _, hidden = raw["enc_w"].shape
    k = kh * kw * cin
    kp = ((k + 7) // 8) * 8
    w_enc = raw["enc_w"].reshape(k, hidden).T                    # (hidden, K)
    w_enc = jnp.pad(w_enc, ((0, 0), (0, kp - k)))                # (hidden, Kp)
    return {
        "w_enc": w_enc.astype(jnp.bfloat16),
        "b_enc": raw["enc_b"].reshape(hidden, 1).astype(jnp.float32),
        "w_ix": raw["int_w"][:cin].T.astype(jnp.bfloat16),       # (hidden, cin)
        "w_ie": raw["int_w"][cin:].T.astype(jnp.bfloat16),       # (hidden, hidden)
        "b_int": raw["int_b"].reshape(hidden, 1).astype(jnp.float32),
        "w_fx": raw["for_w"][:cin].T.astype(jnp.bfloat16),       # (cout, cin)
        "w_fi": raw["for_w"][cin:].T.astype(jnp.bfloat16),       # (cout, hidden)
        "b_for": raw["for_b"].reshape(-1, 1).astype(jnp.float32),
    }


# ----------------------------- pure-JAX reference (for sanity check) -----------------------------
def _reference_forward(raw, batch_nchw):
    x = jnp.transpose(batch_nchw, (0, 2, 3, 1))                  # NHWC
    nb, h, w, c = x.shape
    xp = jnp.pad(x, ((0, 0), (1, 1), (1, 1), (0, 0)))
    patches = [xp[:, dy:dy + h, dx:dx + w, :] for dy in range(KSIZE) for dx in range(KSIZE)]
    cols = jnp.concatenate(patches, axis=-1).reshape(nb * h * w, KSIZE * KSIZE * c)
    enc = jnp.maximum(cols @ raw["enc_w"].reshape(KSIZE * KSIZE * c, -1) + raw["enc_b"], 0.0)
    xf = x.reshape(nb * h * w, c)
    inter = jnp.maximum(jnp.concatenate([xf, enc], -1) @ raw["int_w"] + raw["int_b"], 0.0)
    preds = jnp.concatenate([xf, inter], -1) @ raw["for_w"] + raw["for_b"]
    return jnp.transpose(preds.reshape(nb, h, w, -1), (0, 3, 1, 2))


if __name__ == "__main__":
    key = jax.random.PRNGKey(0)
    k_param, k_data = jax.random.split(key)
    raw = init_params(k_param, cin=CIN, hidden=HIDDEN)
    params = prepare_params(raw, cin=CIN)
    batch = jax.random.normal(k_data, (2, CIN, 16, 16), jnp.float32)   # NCHW

    preds = predictor_forward(params, batch)
    jax.block_until_ready(preds)
    assert preds.shape == (2, CIN, 16, 16) and preds.dtype == jnp.float32

    # Loose sanity check vs. f32 reference (kernel uses bf16 operands with f32 accumulation).
    ref = _reference_forward(raw, batch)
    err = float(jnp.max(jnp.abs(preds - ref)))
    assert err < 1e-1, f"max abs error {err}"

    print("KERNEL_OK")
</pallas_src>

<mosaic_0001>
module attributes {stable_mosaic.version = 11 : i64} {
  func.func @_fused_predictor_kernel(%arg0: i32, %arg1: memref<1x40x256xbf16, #tpu.memory_space<vmem>>, %arg2: memref<32x40xbf16, #tpu.memory_space<vmem>>, %arg3: memref<32x1xf32, #tpu.memory_space<vmem>>, %arg4: memref<32x4xbf16, #tpu.memory_space<vmem>>, %arg5: memref<32x32xbf16, #tpu.memory_space<vmem>>, %arg6: memref<32x1xf32, #tpu.memory_space<vmem>>, %arg7: memref<4x4xbf16, #tpu.memory_space<vmem>>, %arg8: memref<4x32xbf16, #tpu.memory_space<vmem>>, %arg9: memref<4x1xf32, #tpu.memory_space<vmem>>, %arg10: memref<1x4x256xf32, #tpu.memory_space<vmem>>) attributes {dimension_semantics = [#tpu.dimension_semantics<parallel>], iteration_bounds = array<i64: 2>, scalar_prefetch = 0 : i64, scratch_operands = 0 : i64, tpu.core_type = #tpu.core_type<tc>, window_params = [{transform_indices = @transform_0, window_bounds = array<i64: 1, 40, 256>}, {pipeline_mode = #tpu.pipeline_mode<synchronous>, transform_indices = @transform_1, window_bounds = array<i64: 32, 40>}, {pipeline_mode = #tpu.pipeline_mode<synchronous>, transform_indices = @transform_2, window_bounds = array<i64: 32, 1>}, {pipeline_mode = #tpu.pipeline_mode<synchronous>, transform_indices = @transform_3, window_bounds = array<i64: 32, 4>}, {pipeline_mode = #tpu.pipeline_mode<synchronous>, transform_indices = @transform_4, window_bounds = array<i64: 32, 32>}, {pipeline_mode = #tpu.pipeline_mode<synchronous>, transform_indices = @transform_5, window_bounds = array<i64: 32, 1>}, {pipeline_mode = #tpu.pipeline_mode<synchronous>, transform_indices = @transform_6, window_bounds = array<i64: 4, 4>}, {pipeline_mode = #tpu.pipeline_mode<synchronous>, transform_indices = @transform_7, window_bounds = array<i64: 4, 32>}, {pipeline_mode = #tpu.pipeline_mode<synchronous>, transform_indices = @transform_8, window_bounds = array<i64: 4, 1>}, {transform_indices = @transform_9, window_bounds = array<i64: 1, 4, 256>}]} {
    %c0 = arith.constant 0 : index
    %c0_0 = arith.constant 0 : index
    %c0_1 = arith.constant 0 : index
    %0 = vector.load %arg1[%c0, %c0_0, %c0_1] : memref<1x40x256xbf16, #tpu.memory_space<vmem>>, vector<1x40x256xbf16>
    %1 = vector.shape_cast %0 : vector<1x40x256xbf16> to vector<40x256xbf16>
    %2 = vector.extract_strided_slice %1 {offsets = [16, 0], sizes = [4, 256], strides = [1, 1]} : vector<40x256xbf16> to vector<4x256xbf16>
    %c0_2 = arith.constant 0 : index
    %c0_3 = arith.constant 0 : index
    %3 = vector.load %arg2[%c0_2, %c0_3] : memref<32x40xbf16, #tpu.memory_space<vmem>>, vector<32x40xbf16>
    %cst = arith.constant dense<0.000000e+00> : vector<32x256xf32>
    %4 = tpu.matmul %3, %1, %cst {dimension_numbers = #tpu.dot_dimension_numbers<[1], [0], [0], [1], [0, 0, 1, 1], [], []>} : vector<32x40xbf16>, vector<40x256xbf16>, vector<32x256xf32> -> vector<32x256xf32>
    %c0_4 = arith.constant 0 : index
    %c0_5 = arith.constant 0 : index
    %5 = vector.load %arg3[%c0_4, %c0_5] : memref<32x1xf32, #tpu.memory_space<vmem>>, vector<32x1xf32>
    %6 = vector.broadcast %5 : vector<32x1xf32> to vector<32x256xf32>
    %7 = arith.addf %4, %6 : vector<32x256xf32>
    %cst_6 = arith.constant 0.000000e+00 : f32
    %8 = vector.broadcast %cst_6 : f32 to vector<32x256xf32>
    %9 = arith.maximumf %7, %8 : vector<32x256xf32>
    %10 = arith.truncf %9 : vector<32x256xf32> to vector<32x256xbf16>
    %c0_7 = arith.constant 0 : index
    %c0_8 = arith.constant 0 : index
    %11 = vector.load %arg4[%c0_7, %c0_8] : memref<32x4xbf16, #tpu.memory_space<vmem>>, vector<32x4xbf16>
    %cst_9 = arith.constant dense<0.000000e+00> : vector<32x256xf32>
    %12 = tpu.matmul %11, %2, %cst_9 {dimension_numbers = #tpu.dot_dimension_numbers<[1], [0], [0], [1], [0, 0, 1, 1], [], []>} : vector<32x4xbf16>, vector<4x256xbf16>, vector<32x256xf32> -> vector<32x256xf32>
    %c0_10 = arith.constant 0 : index
    %c0_11 = arith.constant 0 : index
    %13 = vector.load %arg5[%c0_10, %c0_11] : memref<32x32xbf16, #tpu.memory_space<vmem>>, vector<32x32xbf16>
    %cst_12 = arith.constant dense<0.000000e+00> : vector<32x256xf32>
    %14 = tpu.matmul %13, %10, %cst_12 {dimension_numbers = #tpu.dot_dimension_numbers<[1], [0], [0], [1], [0, 0, 1, 1], [], []>} : vector<32x32xbf16>, vector<32x256xbf16>, vector<32x256xf32> -> vector<32x256xf32>
    %15 = arith.addf %12, %14 : vector<32x256xf32>
    %c0_13 = arith.constant 0 : index
    %c0_14 = arith.constant 0 : index
    %16 = vector.load %arg6[%c0_13, %c0_14] : memref<32x1xf32, #tpu.memory_space<vmem>>, vector<32x1xf32>
    %17 = vector.broadcast %16 : vector<32x1xf32> to vector<32x256xf32>
    %18 = arith.addf %15, %17 : vector<32x256xf32>
    %cst_15 = arith.constant 0.000000e+00 : f32
    %19 = vector.broadcast %cst_15 : f32 to vector<32x256xf32>
    %20 = arith.maximumf %18, %19 : vector<32x256xf32>
    %21 = arith.truncf %20 : vector<32x256xf32> to vector<32x256xbf16>
    %c0_16 = arith.constant 0 : index
    %c0_17 = arith.constant 0 : index
    %22 = vector.load %arg7[%c0_16, %c0_17] : memref<4x4xbf16, #tpu.memory_space<vmem>>, vector<4x4xbf16>
    %cst_18 = arith.constant dense<0.000000e+00> : vector<4x256xf32>
    %23 = tpu.matmul %22, %2, %cst_18 {dimension_numbers = #tpu.dot_dimension_numbers<[1], [0], [0], [1], [0, 0, 1, 1], [], []>} : vector<4x4xbf16>, vector<4x256xbf16>, vector<4x256xf32> -> vector<4x256xf32>
    %c0_19 = arith.constant 0 : index
    %c0_20 = arith.constant 0 : index
    %24 = vector.load %arg8[%c0_19, %c0_20] : memref<4x32xbf16, #tpu.memory_space<vmem>>, vector<4x32xbf16>
    %cst_21 = arith.constant dense<0.000000e+00> : vector<4x256xf32>
    %25 = tpu.matmul %24, %21, %cst_21 {dimension_numbers = #tpu.dot_dimension_numbers<[1], [0], [0], [1], [0, 0, 1, 1], [], []>} : vector<4x32xbf16>, vector<32x256xbf16>, vector<4x256xf32> -> vector<4x256xf32>
    %26 = arith.addf %23, %25 : vector<4x256xf32>
    %c0_22 = arith.constant 0 : index
    %c0_23 = arith.constant 0 : index
    %27 = vector.load %arg9[%c0_22, %c0_23] : memref<4x1xf32, #tpu.memory_space<vmem>>, vector<4x1xf32>
    %28 = vector.broadcast %27 : vector<4x1xf32> to vector<4x256xf32>
    %29 = arith.addf %26, %28 : vector<4x256xf32>
    %c0_24 = arith.constant 0 : index
    %c0_25 = arith.constant 0 : index
    %c0_26 = arith.constant 0 : index
    %30 = vector.load %arg10[%c0_24, %c0_25, %c0_26] : memref<1x4x256xf32, #tpu.memory_space<vmem>>, vector<1x4x256xf32>
    %31 = vector.shape_cast %30 : vector<1x4x256xf32> to vector<4x256xf32>
    %32 = vector.shape_cast %29 : vector<4x256xf32> to vector<1x4x256xf32>
    tpu.vector_store %arg10[%c0_24, %c0_25, %c0_26], %32 {strides = array<i32>} : memref<1x4x256xf32, #tpu.memory_space<vmem>>, vector<1x4x256xf32>,
    return
  }
  func.func @transform_0(%arg0: i32) -> (i32, i32, i32) {
    %c0_i32 = arith.constant 0 : i32
    %c0_i32_0 = arith.constant 0 : i32
    %c0_i32_1 = arith.constant 0 : i32
    return %arg0, %c0_i32, %c0_i32_0 : i32, i32, i32
  }
  func.func @transform_1(%arg0: i32) -> (i32, i32) {
    %c0_i32 = arith.constant 0 : i32
    %c0_i32_0 = arith.constant 0 : i32
    %c0_i32_1 = arith.constant 0 : i32
    return %c0_i32, %c0_i32_0 : i32, i32
  }
  func.func @transform_2(%arg0: i32) -> (i32, i32) {
    %c0_i32 = arith.constant 0 : i32
    %c0_i32_0 = arith.constant 0 : i32
    %c0_i32_1 = arith.constant 0 : i32
    return %c0_i32, %c0_i32_0 : i32, i32
  }
  func.func @transform_3(%arg0: i32) -> (i32, i32) {
    %c0_i32 = arith.constant 0 : i32
    %c0_i32_0 = arith.constant 0 : i32
    %c0_i32_1 = arith.constant 0 : i32
    return %c0_i32, %c0_i32_0 : i32, i32
  }
  func.func @transform_4(%arg0: i32) -> (i32, i32) {
    %c0_i32 = arith.constant 0 : i32
    %c0_i32_0 = arith.constant 0 : i32
    %c0_i32_1 = arith.constant 0 : i32
    return %c0_i32, %c0_i32_0 : i32, i32
  }
  func.func @transform_5(%arg0: i32) -> (i32, i32) {
    %c0_i32 = arith.constant 0 : i32
    %c0_i32_0 = arith.constant 0 : i32
    %c0_i32_1 = arith.constant 0 : i32
    return %c0_i32, %c0_i32_0 : i32, i32
  }
  func.func @transform_6(%arg0: i32) -> (i32, i32) {
    %c0_i32 = arith.constant 0 : i32
    %c0_i32_0 = arith.constant 0 : i32
    %c0_i32_1 = arith.constant 0 : i32
    return %c0_i32, %c0_i32_0 : i32, i32
  }
  func.func @transform_7(%arg0: i32) -> (i32, i32) {
    %c0_i32 = arith.constant 0 : i32
    %c0_i32_0 = arith.constant 0 : i32
    %c0_i32_1 = arith.constant 0 : i32
    return %c0_i32, %c0_i32_0 : i32, i32
  }
  func.func @transform_8(%arg0: i32) -> (i32, i32) {
    %c0_i32 = arith.constant 0 : i32
    %c0_i32_0 = arith.constant 0 : i32
    %c0_i32_1 = arith.constant 0 : i32
    return %c0_i32, %c0_i32_0 : i32, i32
  }
  func.func @transform_9(%arg0: i32) -> (i32, i32, i32) {
    %c0_i32 = arith.constant 0 : i32
    %c0_i32_0 = arith.constant 0 : i32
    %c0_i32_1 = arith.constant 0 : i32
    return %arg0, %c0_i32, %c0_i32_0 : i32, i32, i32
  }
}

</mosaic_0001>

<llo_original>
// kernel: predictor_forward.1
$region0: #{predictor_forward.1}
  #allocation0 [shape = 'u32[]', space=smem, size = 0x4, offset = 0x4, fixed_abs, tag = 'smem constant byte address 0x4 - core index']
  #allocation1 [shape = 'u32[144,128]{1,0:T(1,128)}', space=vmem, size = 0x12000, scoped, tag = 'internal scratch']
  %s0 = inlined_call_operand.vmem [shape: bf16[2,40,256], index: 0, kind: input, shape index: {}]
  %s1 = inlined_call_operand.vmem [shape: bf16[32,40], index: 1, kind: input, shape index: {}]
  %s2 = inlined_call_operand.vmem [shape: f32[32,1], index: 2, kind: input, shape index: {}]
  %s3 = inlined_call_operand.vmem [shape: bf16[32,4], index: 3, kind: input, shape index: {}]
  %s4 = inlined_call_operand.vmem [shape: bf16[32,32], index: 4, kind: input, shape index: {}]
  %s5 = inlined_call_operand.vmem [shape: f32[32,1], index: 5, kind: input, shape index: {}]
  %s6 = inlined_call_operand.vmem [shape: bf16[4,4], index: 6, kind: input, shape index: {}]
  %s7 = inlined_call_operand.vmem [shape: bf16[4,32], index: 7, kind: input, shape index: {}]
  %s8 = inlined_call_operand.vmem [shape: f32[4,1], index: 8, kind: input, shape index: {}]
  %s9 = inlined_call_operand.vmem [shape: f32[2,4,256], index: 9, kind: output, shape index: {}]
  %s10 = sld [smem:[#allocation0]]
  $region69: #{predictor_forward.1} parent=0
    _
  %s12 = ssub.s32 1, %s10
  %s13 = scalar_select 0, %s12, %s10
  loop: start=0, step=1, limit=4
  $region2: #{predictor_forward.1} parent=0 // loop_pre_header
    _
  $region3: #{predictor_forward.1} parent=0 // loop_header
    %s15 = sphi 0, %s19
    %p16 = scmp.ge.s32.totalorder %s15, 4
    %s25 = sphi 0, %s27
    %s28 = sphi 0, %s25
    %s29 = sphi 0, %s28
    %s45 = sphi 0, %s29
    %s49 = sphi 0, %s49
    %s51 = sphi 0, %s49
    %s52 = sphi 0, %s51
    %s66 = sphi 0, %s52
    %s70 = sphi 0, %s70
    %s72 = sphi 0, %s70
    %s73 = sphi 0, %s72
    %s87 = sphi 0, %s73
    %s91 = sphi 0, %s91
    %s93 = sphi 0, %s91
    %s94 = sphi 0, %s93
    %s108 = sphi 0, %s94
    %s112 = sphi 0, %s112
    %s114 = sphi 0, %s112
    %s115 = sphi 0, %s114
    %s129 = sphi 0, %s115
    %s133 = sphi 0, %s133
    %s135 = sphi 0, %s133
    %s136 = sphi 0, %s135
    %s150 = sphi 0, %s136
    %s154 = sphi 0, %s154
    %s156 = sphi 0, %s154
    %s157 = sphi 0, %s156
    %s171 = sphi 0, %s157
    %s175 = sphi 0, %s175
    %s177 = sphi 0, %s175
    %s178 = sphi 0, %s177
    %s192 = sphi 0, %s178
    %s196 = sphi 0, %s196
    %s198 = sphi 0, %s196
    %s199 = sphi 0, %s198
    %s213 = sphi 0, %s199
    %s219 = sphi 0, %s221
    %s222 = sphi 0, %s219
    %s223 = sphi 0, %s222
    %s239 = sphi 0, %s223
  $region4: #{predictor_forward.1} parent=0 // loop_header_branch
    %18 = sbr.rel (%p16) target = $region8
  $region5: #{predictor_forward.1} parent=0 // loop_body
    %s20 = ssub.s32 %s15, 1
    %s21 = ssub.s32 %s15, 2
    %s22 = sadd.s32 %s15, 1
    %s23 = ssub.s32 %s15, %s22
    %p24 = scmp.eq.s32.totalorder %s23, 0
    %s26 = sadd.s32 %s25, 1
    %s27 = scalar_select %p24, %s25, %s26
    %p30 = pneg %p24
    %p31 = scmp.eq.s32.totalorder %s15, 1
    %p32 = por %p30, %p31
    %p33 = scmp.ne.s32.totalorder %s25, %s28
    %p34 = scmp.eq.s32.totalorder %s15, 0
    %p35 = por %p33, %p34
    %p36 = scmp.ne.s32.totalorder %s25, %s28
    %p37 = scmp.eq.s32.totalorder %s20, 1
    %p38 = por %p36, %p37
    %p39 = scmp.ne.s32.totalorder %s28, %s29
    %p40 = scmp.eq.s32.totalorder %s20, 0
    %p41 = por %p39, %p40
    %p42 = scmp.ne.s32.totalorder %s28, %s29
    %p43 = scmp.eq.s32.totalorder %s21, 1
    %p44 = por %p42, %p43
    %p46 = scmp.ne.s32.totalorder %s29, %s45
    %p47 = scmp.eq.s32.totalorder %s21, 0
    %p48 = por %p46, %p47
    %s50 = sadd.s32 %s49, 1
    %p53 = scmp.eq.s32.totalorder %s15, 1
    %p54 = scmp.ne.s32.totalorder %s49, %s51
    %p55 = scmp.eq.s32.totalorder %s15, 0
    %p56 = por %p54, %p55
    %p57 = scmp.ne.s32.totalorder %s49, %s51
    %p58 = scmp.eq.s32.totalorder %s20, 1
    %p59 = por %p57, %p58
    %p60 = scmp.ne.s32.totalorder %s51, %s52
    %p61 = scmp.eq.s32.totalorder %s20, 0
    %p62 = por %p60, %p61
    %p63 = scmp.ne.s32.totalorder %s51, %s52
    %p64 = scmp.eq.s32.totalorder %s21, 1
    %p65 = por %p63, %p64
    %p67 = scmp.ne.s32.totalorder %s52, %s66
    %p68 = scmp.eq.s32.totalorder %s21, 0
    %p69 = por %p67, %p68
    %s71 = sadd.s32 %s70, 1
    %p74 = scmp.eq.s32.totalorder %s15, 1
    %p75 = scmp.ne.s32.totalorder %s70, %s72
    %p76 = scmp.eq.s32.totalorder %s15, 0
    %p77 = por %p75, %p76
    %p78 = scmp.ne.s32.totalorder %s70, %s72
    %p79 = scmp.eq.s32.totalorder %s20, 1
    %p80 = por %p78, %p79
    %p81 = scmp.ne.s32.totalorder %s72, %s73
    %p82 = scmp.eq.s32.totalorder %s20, 0
    %p83 = por %p81, %p82
    %p84 = scmp.ne.s32.totalorder %s72, %s73
    %p85 = scmp.eq.s32.totalorder %s21, 1
    %p86 = por %p84, %p85
    %p88 = scmp.ne.s32.totalorder %s73, %s87
    %p89 = scmp.eq.s32.totalorder %s21, 0
    %p90 = por %p88, %p89
    %s92 = sadd.s32 %s91, 1
    %p95 = scmp.eq.s32.totalorder %s15, 1
    %p96 = scmp.ne.s32.totalorder %s91, %s93
    %p97 = scmp.eq.s32.totalorder %s15, 0
    %p98 = por %p96, %p97
    %p99 = scmp.ne.s32.totalorder %s91, %s93
    %p100 = scmp.eq.s32.totalorder %s20, 1
    %p101 = por %p99, %p100
    %p102 = scmp.ne.s32.totalorder %s93, %s94
    %p103 = scmp.eq.s32.totalorder %s20, 0
    %p104 = por %p102, %p103
    %p105 = scmp.ne.s32.totalorder %s93, %s94
    %p106 = scmp.eq.s32.totalorder %s21, 1
    %p107 = por %p105, %p106
    %p109 = scmp.ne.s32.totalorder %s94, %s108
    %p110 = scmp.eq.s32.totalorder %s21, 0
    %p111 = por %p109, %p110
    %s113 = sadd.s32 %s112, 1
    %p116 = scmp.eq.s32.totalorder %s15, 1
    %p117 = scmp.ne.s32.totalorder %s112, %s114
    %p118 = scmp.eq.s32.totalorder %s15, 0
    %p119 = por %p117, %p118
    %p120 = scmp.ne.s32.totalorder %s112, %s114
    %p121 = scmp.eq.s32.totalorder %s20, 1
    %p122 = por %p120, %p121
    %p123 = scmp.ne.s32.totalorder %s114, %s115
    %p124 = scmp.eq.s32.totalorder %s20, 0
    %p125 = por %p123, %p124
    %p126 = scmp.ne.s32.totalorder %s114, %s115
    %p127 = scmp.eq.s32.totalorder %s21, 1
    %p128 = por %p126, %p127
    %p130 = scmp.ne.s32.totalorder %s115, %s129
    %p131 = scmp.eq.s32.totalorder %s21, 0
    %p132 = por %p130, %p131
    %s134 = sadd.s32 %s133, 1
    %p137 = scmp.eq.s32.totalorder %s15, 1
    %p138 = scmp.ne.s32.totalorder %s133, %s135
    %p139 = scmp.eq.s32.totalorder %s15, 0
    %p140 = por %p138, %p139
    %p141 = scmp.ne.s32.totalorder %s133, %s135
    %p142 = scmp.eq.s32.totalorder %s20, 1
    %p143 = por %p141, %p142
    %p144 = scmp.ne.s32.totalorder %s135, %s136
    %p145 = scmp.eq.s32.totalorder %s20, 0
    %p146 = por %p144, %p145
    %p147 = scmp.ne.s32.totalorder %s135, %s136
    %p148 = scmp.eq.s32.totalorder %s21, 1
    %p149 = por %p147, %p148
    %p151 = scmp.ne.s32.totalorder %s136, %s150
    %p152 = scmp.eq.s32.totalorder %s21, 0
    %p153 = por %p151, %p152
    %s155 = sadd.s32 %s154, 1
    %p158 = scmp.eq.s32.totalorder %s15, 1
    %p159 = scmp.ne.s32.totalorder %s154, %s156
    %p160 = scmp.eq.s32.totalorder %s15, 0
    %p161 = por %p159, %p160
    %p162 = scmp.ne.s32.totalorder %s154, %s156
    %p163 = scmp.eq.s32.totalorder %s20, 1
    %p164 = por %p162, %p163
    %p165 = scmp.ne.s32.totalorder %s156, %s157
    %p166 = scmp.eq.s32.totalorder %s20, 0
    %p167 = por %p165, %p166
    %p168 = scmp.ne.s32.totalorder %s156, %s157
    %p169 = scmp.eq.s32.totalorder %s21, 1
    %p170 = por %p168, %p169
    %p172 = scmp.ne.s32.totalorder %s157, %s171
    %p173 = scmp.eq.s32.totalorder %s21, 0
    %p174 = por %p172, %p173
    %s176 = sadd.s32 %s175, 1
    %p179 = scmp.eq.s32.totalorder %s15, 1
    %p180 = scmp.ne.s32.totalorder %s175, %s177
    %p181 = scmp.eq.s32.totalorder %s15, 0
    %p182 = por %p180, %p181
    %p183 = scmp.ne.s32.totalorder %s175, %s177
    %p184 = scmp.eq.s32.totalorder %s20, 1
    %p185 = por %p183, %p184
    %p186 = scmp.ne.s32.totalorder %s177, %s178
    %p187 = scmp.eq.s32.totalorder %s20, 0
    %p188 = por %p186, %p187
    %p189 = scmp.ne.s32.totalorder %s177, %s178
    %p190 = scmp.eq.s32.totalorder %s21, 1
    %p191 = por %p189, %p190
    %p193 = scmp.ne.s32.totalorder %s178, %s192
    %p194 = scmp.eq.s32.totalorder %s21, 0
    %p195 = por %p193, %p194
    %s197 = sadd.s32 %s196, 1
    %p200 = scmp.eq.s32.totalorder %s15, 1
    %p201 = scmp.ne.s32.totalorder %s196, %s198
    %p202 = scmp.eq.s32.totalorder %s15, 0
    %p203 = por %p201, %p202
    %p204 = scmp.ne.s32.totalorder %s196, %s198
    %p205 = scmp.eq.s32.totalorder %s20, 1
    %p206 = por %p204, %p205
    %p207 = scmp.ne.s32.totalorder %s198, %s199
    %p208 = scmp.eq.s32.totalorder %s20, 0
    %p209 = por %p207, %p208
    %p210 = scmp.ne.s32.totalorder %s198, %s199
    %p211 = scmp.eq.s32.totalorder %s21, 1
    %p212 = por %p210, %p211
    %p214 = scmp.ne.s32.totalorder %s199, %s213
    %p215 = scmp.eq.s32.totalorder %s21, 0
    %p216 = por %p214, %p215
    %s217 = ssub.s32 %s15, %s22
    %p218 = scmp.eq.s32.totalorder %s217, 0
    %s220 = sadd.s32 %s219, 1
    %s221 = scalar_select %p218, %s219, %s220
    %p224 = pneg %p218
    %p225 = scmp.eq.s32.totalorder %s15, 1
    %p226 = por %p224, %p225
    %p227 = scmp.ne.s32.totalorder %s219, %s222
    %p228 = scmp.eq.s32.totalorder %s15, 0
    %p229 = por %p227, %p228
    %p230 = scmp.ne.s32.totalorder %s219, %s222
    %p231 = scmp.eq.s32.totalorder %s20, 1
    %p232 = por %p230, %p231
    %p233 = scmp.ne.s32.totalorder %s222, %s223
    %p234 = scmp.eq.s32.totalorder %s20, 0
    %p235 = por %p233, %p234
    %p236 = scmp.ne.s32.totalorder %s222, %s223
    %p237 = scmp.eq.s32.totalorder %s21, 1
    %p238 = por %p236, %p237
    %p240 = scmp.ne.s32.totalorder %s223, %s239
    %p241 = scmp.eq.s32.totalorder %s21, 0
    %p242 = por %p240, %p241
    %p243 = scmp.le.s32.totalorder 1, %s15
    %p244 = scmp.lt.s32.totalorder %s15, 3
    %p245 = pnand %p243, %p244
    %p246 = pneg %p245
    // Predicated region
    $region9: #{predictor_forward.1} parent=5 // pred_check
      _
    $region10: #{predictor_forward.1} parent=5 // pred_check_branch
      %248 = sbr.rel (%p245) target = $region12
    $region11: #{predictor_forward.1} parent=5 // pred_region
      %s249 = ssub.s32 %s15, 1
      // Predicated region
      $region13: #{predictor_forward.1} parent=11 // pred_check
        %p250 = pneg %p62
      $region14: #{predictor_forward.1} parent=11 // pred_check_branch
        %252 = sbr.rel (%p250) target = $region16
      $region15: #{predictor_forward.1} parent=11 // pred_region
        _
      $region16: #{predictor_forward.1} parent=11 // pred_fallthru
        _
      // Predicated region
      $region17: #{predictor_forward.1} parent=11 // pred_check
        %p253 = pneg %p83
      $region18: #{predictor_forward.1} parent=11 // pred_check_branch
        %255 = sbr.rel (%p253) target = $region20
      $region19: #{predictor_forward.1} parent=11 // pred_region
        _
      $region20: #{predictor_forward.1} parent=11 // pred_fallthru
        _
      // Predicated region
      $region21: #{predictor_forward.1} parent=11 // pred_check
        %p256 = pneg %p104
      $region22: #{predictor_forward.1} parent=11 // pred_check_branch
        %258 = sbr.rel (%p256) target = $region24
      $region23: #{predictor_forward.1} parent=11 // pred_region
        _
      $region24: #{predictor_forward.1} parent=11 // pred_fallthru
        _
      // Predicated region
      $region25: #{predictor_forward.1} parent=11 // pred_check
        %p259 = pneg %p125
      $region26: #{predictor_forward.1} parent=11 // pred_check_branch
        %261 = sbr.rel (%p259) target = $region28
      $region27: #{predictor_forward.1} parent=11 // pred_region
        _
      $region28: #{predictor_forward.1} parent=11 // pred_fallthru
        _
      // Predicated region
      $region29: #{predictor_forward.1} parent=11 // pred_check
        %p262 = pneg %p146
      $region30: #{predictor_forward.1} parent=11 // pred_check_branch
        %264 = sbr.rel (%p262) target = $region32
      $region31: #{predictor_forward.1} parent=11 // pred_region
        _
      $region32: #{predictor_forward.1} parent=11 // pred_fallthru
        _
      // Predicated region
      $region33: #{predictor_forward.1} parent=11 // pred_check
        %p265 = pneg %p167
      $region34: #{predictor_forward.1} parent=11 // pred_check_branch
        %267 = sbr.rel (%p265) target = $region36
      $region35: #{predictor_forward.1} parent=11 // pred_region
        _
      $region36: #{predictor_forward.1} parent=11 // pred_fallthru
        _
      // Predicated region
      $region37: #{predictor_forward.1} parent=11 // pred_check
        %p268 = pneg %p188
      $region38: #{predictor_forward.1} parent=11 // pred_check_branch
        %270 = sbr.rel (%p268) target = $region40
      $region39: #{predictor_forward.1} parent=11 // pred_region
        _
      $region40: #{predictor_forward.1} parent=11 // pred_fallthru
        _
      // Predicated region
      $region41: #{predictor_forward.1} parent=11 // pred_check
        %p271 = pneg %p209
      $region42: #{predictor_forward.1} parent=11 // pred_check_branch
        %273 = sbr.rel (%p271) target = $region44
      $region43: #{predictor_forward.1} parent=11 // pred_region
        _
      $region44: #{predictor_forward.1} parent=11 // pred_fallthru
        _
    $region12: #{predictor_forward.1} parent=5 // pred_fallthru
      _
    %p274 = scmp.lt.s32.totalorder %s15, 2
    // Predicated region
    $region45: #{predictor_forward.1} parent=5 // pred_check
      %p275 = pneg %p274
    $region46: #{predictor_forward.1} parent=5 // pred_check_branch
      %277 = sbr.rel (%p275) target = $region48
    $region47: #{predictor_forward.1} parent=5 // pred_region
      // Predicated region
      $region49: #{predictor_forward.1} parent=47 // pred_check
        %p278 = pneg %p35
      $region50: #{predictor_forward.1} parent=47 // pred_check_branch
        %280 = sbr.rel (%p278) target = $region52
      $region51: #{predictor_forward.1} parent=47 // pred_region
        %p281 = scmp.lt.s32.totalorder %s15, 1
        %s282 = scalar_select %p281, %s15, 1
        %s283 = smul.addr %s282, 10
        %s284 = smul.addr %s283, 4
        %s285 = scalar_lea.vmem %s0, %s284
      $region52: #{predictor_forward.1} parent=47 // pred_fallthru
        _
    $region48: #{predictor_forward.1} parent=5 // pred_fallthru
      _
    %p286 = scmp.le.s32.totalorder 1, %s15
    %p287 = scmp.lt.s32.totalorder %s15, 3
    %p288 = pnand %p286, %p287
    %p289 = pneg %p288
    // Predicated region
    $region53: #{predictor_forward.1} parent=5 // pred_check
      _
    $region54: #{predictor_forward.1} parent=5 // pred_check_branch
      %291 = sbr.rel (%p288) target = $region56
    $region55: #{predictor_forward.1} parent=5 // pred_region
      %s292 = ssub.s32 %s15, 1
      %p293 = scmp.lt.s32.totalorder %s20, 1
      %s294 = scalar_select %p293, %s20, 1
      %s295 = smul.addr %s294, 10
      %s296 = smul.addr %s295, 4
      %s297 = scalar_lea.vmem %s0, %s296
      %p298 = pneg %p41
      %p299 = pneg %p38
      %p300 = pneg %p62
      %p301 = pneg %p59
      %p302 = pneg %p83
      %p303 = pneg %p80
      %p304 = pneg %p104
      %p305 = pneg %p101
      %p306 = pneg %p125
      %p307 = pneg %p122
      %p308 = pneg %p146
      %p309 = pneg %p143
      %p310 = pneg %p167
      %p311 = pneg %p164
      %p312 = pneg %p188
      %p313 = pneg %p185
      %p314 = pneg %p209
      %p315 = pneg %p206
      %p316 = pneg %p235
      %p317 = pneg %p232
      %p318 = scmp.lt.s32.totalorder %s20, 1
      %s319 = scalar_select %p318, %s20, 1
      %s320 = smul.addr %s319, 2
      %s321 = smul.addr %s320, 4
      %s322 = scalar_lea.vmem %s9, %s321
      %p323 = scmp.lt.s32.totalorder %s20, 1
      %s324 = scalar_select %p323, %s20, 1
      %s325 = smul.addr %s324, 10
      %s326 = smul.addr %s325, 4
      %s327 = scalar_lea.vmem %s0, %s326
      %p328 = scmp.lt.s32.totalorder %s20, 1
      %s329 = scalar_select %p328, %s20, 1
      %s330 = smul.addr %s329, 2
      %s331 = smul.addr %s330, 4
      %s332 = scalar_lea.vmem %s9, %s331
      %v334 = vld [vmem:[%s327] sm:$0xff]
      %v335 = vld [vmem:[%s327 + $0x8] sm:$0xff]
      %v336 = vld [vmem:[%s327 + $0x10] sm:$0xff]
      %v337 = vld [vmem:[%s327 + $0x18] sm:$0xff]
      %v338 = vld [vmem:[%s327 + $0x20] sm:$0xff]
      %v339 = vld [vmem:[%s1] sm:$0xf]
      %v340 = vld [vmem:[%s1 + $0x4] sm:$0xf]
      %v341 = vld [vmem:[%s1 + $0x8] sm:$0xf]
      %v342 = vld [vmem:[%s1 + $0xc] sm:$0xf]
      %v343 = vld [vmem:[%s2] sm:$0xff]
      %v344 = vld [vmem:[%s2 + $0x8] sm:$0xff]
      %v345 = vld [vmem:[%s2 + $0x10] sm:$0xff]
      %v346 = vld [vmem:[%s2 + $0x18] sm:$0xff]
      %348 = vset.pattern.permute.xlu0 0
      %349 = vperm.xlu0 %348, %v343
      %v350 = vpop.permute.xlu0 %349
      %353 = vset.pattern.permute.xlu0 0
      %354 = vperm.xlu0 %353, %v344
      %v355 = vpop.permute.xlu0 %354
      %358 = vset.pattern.permute.xlu0 0
      %359 = vperm.xlu0 %358, %v345
      %v360 = vpop.permute.xlu0 %359
      %363 = vset.pattern.permute.xlu0 0
      %364 = vperm.xlu0 %363, %v346
      %v365 = vpop.permute.xlu0 %364
      %v371 = vunpack.c.l.b16 %v339
      %v372 = vunpack.c.l.b16 %v340
      %v373 = vunpack.c.l.b16 %v341
      %v374 = vunpack.c.l.b16 %v342
      %v375 = vpack.c.b16 %v372, %v371
      %v376 = vpack.c.b16 %v374, %v373
      %v382 = vunpack.c.l.b16 %v334
      %v383 = vunpack.c.h.b16 %v334
      %v384 = vunpack.c.l.b16 %v335
      %v385 = vunpack.c.h.b16 %v335
      %v386 = vunpack.c.l.b16 %v336
      %v387 = vunpack.c.h.b16 %v336
      %v388 = vunpack.c.l.b16 %v337
      %v389 = vunpack.c.h.b16 %v337
      %v390 = vunpack.c.l.b16 %v338
      %v391 = vunpack.c.h.b16 %v338
      %v392 = vpack.c.b16 %v384, %v382
      %v393 = vpack.c.b16 %v385, %v383
      %v394 = vpack.c.b16 %v388, %v386
      %v395 = vpack.c.b16 %v389, %v387
      %v396 = vpack.c.b16 %v390, %v390
      %v397 = vpack.c.b16 %v391, %v391
      %vm402 = vcmask 326656
      %v404 = vsel %vm402, %v375, 0
      %v407 = vsel %vm402, %v376, 0
      %vm409 = vcmask 1043456
      %v411 = vsel %vm409, %v396, 0
      %v414 = vsel %vm409, %v397, 0
      %416 = vmatprep.subr.bf16.mxu0 0
      %417 = vmatpush1.bf16.msra.mxu0 0
      %418 = vmatprep.subr.bf16.mxu0 0
      %419 = vmatpush1.bf16.msra.mxu0 0
      %420 = vmatprep.subr.bf16.mxu0 0
      %421 = vmatpush1.bf16.msra.mxu0 0
      %422 = vmatprep.subr.bf16.mxu0 0
      %423 = vmatpush1.bf16.msra.mxu0 0
      %424 = vmatprep.subr.bf16.mxu0 0
      %425 = vmatpush1.bf16.msra.mxu0 0
      %426 = vmatprep.subr.bf16.mxu0 %v414
      %427 = vmatpush1.bf16.msra.mxu0 %v411
      %428 = vmatprep.subr.bf16.mxu0 %v395
      %429 = vmatpush1.bf16.msra.mxu0 %v394
      %430 = vmatprep.subr.bf16.mxu0 %v393
      %431 = vmatpush1.bf16.msra.mxu0 %v392
      %432 = vmatprep.subr.bf16.mxu0 0
      %433 = vmatpush2.bf16.msra.mxu0 0
      %434 = vmatprep.subr.bf16.mxu0 0
      %435 = vmatpush2.bf16.msra.mxu0 0
      %436 = vmatprep.subr.bf16.mxu0 0
      %437 = vmatpush2.bf16.msra.mxu0 0
      %438 = vmatprep.subr.bf16.mxu0 0
      %439 = vmatpush2.bf16.msra.mxu0 0
      %440 = vmatprep.subr.bf16.mxu0 0
      %441 = vmatpush2.bf16.msra.mxu0 0
      %442 = vmatprep.subr.bf16.mxu0 0
      %443 = vmatpush2.bf16.msra.mxu0 0
      %444 = vmatprep.subr.bf16.mxu0 0
      %445 = vmatpush2.bf16.msra.mxu0 0
      %446 = vmatprep.subr.bf16.mxu0 0
      %447 = vmatpush2.bf16.msra.mxu0 0
      %448 = vmatprep.mubr.bf16.mxu0 0
      %449 = vmatmul.mubr.bf16.gmra.mxu0 %v404
      %v450 = vpop.f32.mrf.mxu0
      %v451 = vadd.f32 %v350, %v450
      %v452 = vpop.f32.mrf.mxu0
      %v453 = vadd.f32 %v350, %v452
      %v454 = vpop.f32.mrf.mxu0
      %v455 = vadd.f32 %v355, %v454
      %v456 = vpop.f32.mrf.mxu0
      %v457 = vadd.f32 %v355, %v456
      %458 = vmatprep.mubr.bf16.mxu0 0
      %459 = vmatmul.mubr.bf16.gmra.mxu0 %v407
      %v460 = vpop.f32.mrf.mxu0
      %v461 = vadd.f32 %v360, %v460
      %v462 = vpop.f32.mrf.mxu0
      %v463 = vadd.f32 %v360, %v462
      %v464 = vpop.f32.mrf.mxu0
      %v465 = vadd.f32 %v365, %v464
      %v466 = vpop.f32.mrf.mxu0
      %v467 = vadd.f32 %v365, %v466
      %468 = vdwg.mxu0
      %v469 = vmax.f32 %v451, 0.0
      %v470 = vmax.f32 %v453, 0.0
      %v471 = vmax.f32 %v455, 0.0
      %v472 = vmax.f32 %v457, 0.0
      %v473 = vmax.f32 %v461, 0.0
      %v474 = vmax.f32 %v463, 0.0
      %v475 = vmax.f32 %v465, 0.0
      %v476 = vmax.f32 %v467, 0.0
      %v477 = vpack.c.bf16 %v471, %v469
      %v478 = vpack.c.bf16 %v472, %v470
      %v479 = vpack.c.bf16 %v475, %v473
      %v480 = vpack.c.bf16 %v476, %v474
      %v481 = vld [vmem:[%s3] sm:$0xf]
      %v482 = vld [vmem:[%s3 + $0x4] sm:$0xf]
      %v483 = vld [vmem:[%s3 + $0x8] sm:$0xf]
      %v484 = vld [vmem:[%s3 + $0xc] sm:$0xf]
      %v485 = vld [vmem:[%s4] sm:$0xf]
      %v486 = vld [vmem:[%s4 + $0x4] sm:$0xf]
      %v487 = vld [vmem:[%s4 + $0x8] sm:$0xf]
      %v488 = vld [vmem:[%s4 + $0xc] sm:$0xf]
      %v493 = vunpack.c.l.b16 %v485
      %v494 = vunpack.c.l.b16 %v486
      %v495 = vunpack.c.l.b16 %v487
      %v496 = vunpack.c.l.b16 %v488
      %v497 = vpack.c.b16 %v494, %v493
      %v498 = vpack.c.b16 %v496, %v495
      %vm499 = vcmask 261120
      %v501 = vsel %vm499, %v497, 0
      %v504 = vsel %vm499, %v498, 0
      %506 = vmatprep.subr.bf16.mxu0 0
      %507 = vmatpush1.bf16.msra.mxu0 0
      %508 = vmatprep.subr.bf16.mxu0 0
      %509 = vmatpush1.bf16.msra.mxu0 0
      %510 = vmatprep.subr.bf16.mxu0 0
      %511 = vmatpush1.bf16.msra.mxu0 0
      %512 = vmatprep.subr.bf16.mxu0 0
      %513 = vmatpush1.bf16.msra.mxu0 0
      %514 = vmatprep.subr.bf16.mxu0 0
      %515 = vmatpush1.bf16.msra.mxu0 0
      %516 = vmatprep.subr.bf16.mxu0 0
      %517 = vmatpush1.bf16.msra.mxu0 0
      %518 = vmatprep.subr.bf16.mxu0 %v480
      %519 = vmatpush1.bf16.msra.mxu0 %v479
      %520 = vmatprep.subr.bf16.mxu0 %v478
      %521 = vmatpush1.bf16.msra.mxu0 %v477
      %522 = vmatprep.subr.bf16.mxu0 0
      %523 = vmatpush2.bf16.msra.mxu0 0
      %524 = vmatprep.subr.bf16.mxu0 0
      %525 = vmatpush2.bf16.msra.mxu0 0
      %526 = vmatprep.subr.bf16.mxu0 0
      %527 = vmatpush2.bf16.msra.mxu0 0
      %528 = vmatprep.subr.bf16.mxu0 0
      %529 = vmatpush2.bf16.msra.mxu0 0
      %530 = vmatprep.subr.bf16.mxu0 0
      %531 = vmatpush2.bf16.msra.mxu0 0
      %532 = vmatprep.subr.bf16.mxu0 0
      %533 = vmatpush2.bf16.msra.mxu0 0
      %534 = vmatprep.subr.bf16.mxu0 0
      %535 = vmatpush2.bf16.msra.mxu0 0
      %536 = vmatprep.subr.bf16.mxu0 0
      %537 = vmatpush2.bf16.msra.mxu0 0
      %538 = vmatprep.mubr.bf16.mxu0 0
      %539 = vmatmul.mubr.bf16.gmra.mxu0 %v501
      %v540 = vpop.f32.mrf.mxu0
      %v541 = vadd.f32 0.0, %v540
      %v542 = vpop.f32.mrf.mxu0
      %v543 = vadd.f32 0.0, %v542
      %v544 = vpop.f32.mrf.mxu0
      %v545 = vadd.f32 0.0, %v544
      %v546 = vpop.f32.mrf.mxu0
      %v547 = vadd.f32 0.0, %v546
      %548 = vmatprep.mubr.bf16.mxu0 0
      %549 = vmatmul.mubr.bf16.gmra.mxu0 %v504
      %v550 = vpop.f32.mrf.mxu0
      %v551 = vadd.f32 0.0, %v550
      %v552 = vpop.f32.mrf.mxu0
      %v553 = vadd.f32 0.0, %v552
      %v554 = vpop.f32.mrf.mxu0
      %v555 = vadd.f32 0.0, %v554
      %v556 = vpop.f32.mrf.mxu0
      %v557 = vadd.f32 0.0, %v556
      %558 = vdwg.mxu0
      %v563 = vunpack.c.l.b16 %v481
      %v564 = vunpack.c.l.b16 %v482
      %v565 = vunpack.c.l.b16 %v483
      %v566 = vunpack.c.l.b16 %v484
      %v567 = vpack.c.b16 %v564, %v563
      %v568 = vpack.c.b16 %v566, %v565
      %v569 = vpack.c.b16 %v386, %v386
      %v570 = vpack.c.b16 %v387, %v387
      %vm571 = vcmask 31744
      %v573 = vsel %vm571, %v567, 0
      %v576 = vsel %vm571, %v568, 0
      %vm578 = vcmask 1041408
      %v580 = vsel %vm578, %v569, 0
      %v583 = vsel %vm578, %v570, 0
      %585 = vmatprep.subr.bf16.mxu0 0
      %586 = vmatpush1.bf16.msra.mxu0 0
      %587 = vmatprep.subr.bf16.mxu0 0
      %588 = vmatpush1.bf16.msra.mxu0 0
      %589 = vmatprep.subr.bf16.mxu0 0
      %590 = vmatpush1.bf16.msra.mxu0 0
      %591 = vmatprep.subr.bf16.mxu0 0
      %592 = vmatpush1.bf16.msra.mxu0 0
      %593 = vmatprep.subr.bf16.mxu0 0
      %594 = vmatpush1.bf16.msra.mxu0 0
      %595 = vmatprep.subr.bf16.mxu0 0
      %596 = vmatpush1.bf16.msra.mxu0 0
      %597 = vmatprep.subr.bf16.mxu0 0
      %598 = vmatpush1.bf16.msra.mxu0 0
      %599 = vmatprep.subr.bf16.mxu0 %v583
      %600 = vmatpush1.bf16.msra.mxu0 %v580
      %601 = vmatprep.subr.bf16.mxu0 0
      %602 = vmatpush2.bf16.msra.mxu0 0
      %603 = vmatprep.subr.bf16.mxu0 0
      %604 = vmatpush2.bf16.msra.mxu0 0
      %605 = vmatprep.subr.bf16.mxu0 0
      %606 = vmatpush2.bf16.msra.mxu0 0
      %607 = vmatprep.subr.bf16.mxu0 0
      %608 = vmatpush2.bf16.msra.mxu0 0
      %609 = vmatprep.subr.bf16.mxu0 0
      %610 = vmatpush2.bf16.msra.mxu0 0
      %611 = vmatprep.subr.bf16.mxu0 0
      %612 = vmatpush2.bf16.msra.mxu0 0
      %613 = vmatprep.subr.bf16.mxu0 0
      %614 = vmatpush2.bf16.msra.mxu0 0
      %615 = vmatprep.subr.bf16.mxu0 0
      %616 = vmatpush2.bf16.msra.mxu0 0
      %617 = vmatprep.mubr.bf16.mxu0 0
      %618 = vmatmul.mubr.bf16.gmra.mxu0 %v573
      %v619 = vpop.f32.mrf.mxu0
      %v620 = vadd.f32 %v541, %v619
      %v621 = vpop.f32.mrf.mxu0
      %v622 = vadd.f32 %v543, %v621
      %v623 = vpop.f32.mrf.mxu0
      %v624 = vadd.f32 %v545, %v623
      %v625 = vpop.f32.mrf.mxu0
      %v626 = vadd.f32 %v547, %v625
      %627 = vmatprep.mubr.bf16.mxu0 0
      %628 = vmatmul.mubr.bf16.gmra.mxu0 %v576
      %v629 = vpop.f32.mrf.mxu0
      %v630 = vadd.f32 %v551, %v629
      %v631 = vpop.f32.mrf.mxu0
      %v632 = vadd.f32 %v553, %v631
      %v633 = vpop.f32.mrf.mxu0
      %v634 = vadd.f32 %v555, %v633
      %v635 = vpop.f32.mrf.mxu0
      %v636 = vadd.f32 %v557, %v635
      %637 = vdwg.mxu0
      %v638 = vld [vmem:[%s5] sm:$0xff]
      %v639 = vld [vmem:[%s5 + $0x8] sm:$0xff]
      %v640 = vld [vmem:[%s5 + $0x10] sm:$0xff]
      %v641 = vld [vmem:[%s5 + $0x18] sm:$0xff]
      %643 = vset.pattern.permute.xlu0 0
      %644 = vperm.xlu0 %643, %v638
      %v645 = vpop.permute.xlu0 %644
      %648 = vset.pattern.permute.xlu0 0
      %649 = vperm.xlu0 %648, %v639
      %v650 = vpop.permute.xlu0 %649
      %653 = vset.pattern.permute.xlu0 0
      %654 = vperm.xlu0 %653, %v640
      %v655 = vpop.permute.xlu0 %654
      %658 = vset.pattern.permute.xlu0 0
      %659 = vperm.xlu0 %658, %v641
      %v660 = vpop.permute.xlu0 %659
      %v662 = vadd.f32 %v620, %v645
      %v663 = vadd.f32 %v622, %v645
      %v664 = vadd.f32 %v624, %v650
      %v665 = vadd.f32 %v626, %v650
      %v666 = vadd.f32 %v630, %v655
      %v667 = vadd.f32 %v632, %v655
      %v668 = vadd.f32 %v634, %v660
      %v669 = vadd.f32 %v636, %v660
      %v670 = vmax.f32 %v662, 0.0
      %v671 = vmax.f32 %v663, 0.0
      %v672 = vmax.f32 %v664, 0.0
      %v673 = vmax.f32 %v665, 0.0
      %v674 = vmax.f32 %v666, 0.0
      %v675 = vmax.f32 %v667, 0.0
      %v676 = vmax.f32 %v668, 0.0
      %v677 = vmax.f32 %v669, 0.0
      %v678 = vpack.c.bf16 %v672, %v670
      %v679 = vpack.c.bf16 %v673, %v671
      %v680 = vpack.c.bf16 %v676, %v674
      %v681 = vpack.c.bf16 %v677, %v675
      %v682 = vld [vmem:[%s6] sm:$0x3]
      %v683 = vld [vmem:[%s7] sm:$0x3]
      %v685 = vsel %vm499, %v683, 0
      %687 = vmatprep.subr.bf16.mxu0 0
      %688 = vmatpush1.bf16.msra.mxu0 0
      %689 = vmatprep.subr.bf16.mxu0 0
      %690 = vmatpush1.bf16.msra.mxu0 0
      %691 = vmatprep.subr.bf16.mxu0 0
      %692 = vmatpush1.bf16.msra.mxu0 0
      %693 = vmatprep.subr.bf16.mxu0 0
      %694 = vmatpush1.bf16.msra.mxu0 0
      %695 = vmatprep.subr.bf16.mxu0 0
      %696 = vmatpush1.bf16.msra.mxu0 0
      %697 = vmatprep.subr.bf16.mxu0 0
      %698 = vmatpush1.bf16.msra.mxu0 0
      %699 = vmatprep.subr.bf16.mxu0 %v681
      %700 = vmatpush1.bf16.msra.mxu0 %v680
      %701 = vmatprep.subr.bf16.mxu0 %v679
      %702 = vmatpush1.bf16.msra.mxu0 %v678
      %703 = vmatprep.subr.bf16.mxu0 0
      %704 = vmatpush2.bf16.msra.mxu0 0
      %705 = vmatprep.subr.bf16.mxu0 0
      %706 = vmatpush2.bf16.msra.mxu0 0
      %707 = vmatprep.subr.bf16.mxu0 0
      %708 = vmatpush2.bf16.msra.mxu0 0
      %709 = vmatprep.subr.bf16.mxu0 0
      %710 = vmatpush2.bf16.msra.mxu0 0
      %711 = vmatprep.subr.bf16.mxu0 0
      %712 = vmatpush2.bf16.msra.mxu0 0
      %713 = vmatprep.subr.bf16.mxu0 0
      %714 = vmatpush2.bf16.msra.mxu0 0
      %715 = vmatprep.subr.bf16.mxu0 0
      %716 = vmatpush2.bf16.msra.mxu0 0
      %717 = vmatprep.subr.bf16.mxu0 0
      %718 = vmatpush2.bf16.msra.mxu0 0
      %719 = vmatprep.mubr.bf16.mxu0 0
      %720 = vmatmul.mubr.bf16.gmra.mxu0 %v685
      %v721 = vpop.f32.mrf.mxu0
      %v722 = vadd.f32 0.0, %v721
      %v723 = vpop.f32.mrf.mxu0
      %v724 = vadd.f32 0.0, %v723
      %v725 = vpop.f32.mrf.mxu0
      %v726 = vpop.f32.mrf.mxu0
      %727 = vdwg.mxu0
      %v729 = vsel %vm571, %v682, 0
      %731 = vmatprep.subr.bf16.mxu0 0
      %732 = vmatpush1.bf16.msra.mxu0 0
      %733 = vmatprep.subr.bf16.mxu0 0
      %734 = vmatpush1.bf16.msra.mxu0 0
      %735 = vmatprep.subr.bf16.mxu0 0
      %736 = vmatpush1.bf16.msra.mxu0 0
      %737 = vmatprep.subr.bf16.mxu0 0
      %738 = vmatpush1.bf16.msra.mxu0 0
      %739 = vmatprep.subr.bf16.mxu0 0
      %740 = vmatpush1.bf16.msra.mxu0 0
      %741 = vmatprep.subr.bf16.mxu0 0
      %742 = vmatpush1.bf16.msra.mxu0 0
      %743 = vmatprep.subr.bf16.mxu0 0
      %744 = vmatpush1.bf16.msra.mxu0 0
      %745 = vmatprep.subr.bf16.mxu0 %v583
      %746 = vmatpush1.bf16.msra.mxu0 %v580
      %747 = vmatprep.subr.bf16.mxu0 0
      %748 = vmatpush2.bf16.msra.mxu0 0
      %749 = vmatprep.subr.bf16.mxu0 0
      %750 = vmatpush2.bf16.msra.mxu0 0
      %751 = vmatprep.subr.bf16.mxu0 0
      %752 = vmatpush2.bf16.msra.mxu0 0
      %753 = vmatprep.subr.bf16.mxu0 0
      %754 = vmatpush2.bf16.msra.mxu0 0
      %755 = vmatprep.subr.bf16.mxu0 0
      %756 = vmatpush2.bf16.msra.mxu0 0
      %757 = vmatprep.subr.bf16.mxu0 0
      %758 = vmatpush2.bf16.msra.mxu0 0
      %759 = vmatprep.subr.bf16.mxu0 0
      %760 = vmatpush2.bf16.msra.mxu0 0
      %761 = vmatprep.subr.bf16.mxu0 0
      %762 = vmatpush2.bf16.msra.mxu0 0
      %763 = vmatprep.mubr.bf16.mxu0 0
      %764 = vmatmul.mubr.bf16.gmra.mxu0 %v729
      %v765 = vpop.f32.mrf.mxu0
      %v766 = vadd.f32 %v722, %v765
      %v767 = vpop.f32.mrf.mxu0
      %v768 = vadd.f32 %v724, %v767
      %v769 = vpop.f32.mrf.mxu0
      %v770 = vpop.f32.mrf.mxu0
      %771 = vdwg.mxu0
      %v772 = vld [vmem:[%s8] sm:$0xf]
      %774 = vset.pattern.permute.xlu0 0
      %775 = vperm.xlu0 %774, %v772
      %v776 = vpop.permute.xlu0 %775
      %v778 = vadd.f32 %v766, %v776
      %v779 = vadd.f32 %v768, %v776
      %v782 = vcombine.low %v778, %v779
      %784 = vst [vmem:[%s332] sm:$0xff] %v782
      %p785 = scmp.lt.s32.totalorder %s20, 1
      %s786 = scalar_select %p785, %s20, 1
      %s787 = smul.addr %s786, 2
      %s788 = smul.addr %s787, 4
      %s789 = scalar_lea.vmem %s9, %s788
      // Predicated region
      $region57: #{predictor_forward.1} parent=55 // pred_check
        %p790 = pneg %p232
      $region58: #{predictor_forward.1} parent=55 // pred_check_branch
        %792 = sbr.rel (%p790) target = $region60
      $region59: #{predictor_forward.1} parent=55 // pred_region
        _
      $region60: #{predictor_forward.1} parent=55 // pred_fallthru
        _
    $region56: #{predictor_forward.1} parent=5 // pred_fallthru
      _
    %p793 = scmp.le.s32.totalorder 2, %s15
    // Predicated region
    $region61: #{predictor_forward.1} parent=5 // pred_check
      %p794 = pneg %p793
    $region62: #{predictor_forward.1} parent=5 // pred_check_branch
      %796 = sbr.rel (%p794) target = $region64
    $region63: #{predictor_forward.1} parent=5 // pred_region
      %s797 = ssub.s32 %s15, 2
      // Predicated region
      $region65: #{predictor_forward.1} parent=63 // pred_check
        %p798 = pneg %p238
      $region66: #{predictor_forward.1} parent=63 // pred_check_branch
        %800 = sbr.rel (%p798) target = $region68
      $region67: #{predictor_forward.1} parent=63 // pred_region
        %p801 = scmp.lt.s32.totalorder %s21, 1
        %s802 = scalar_select %p801, %s21, 1
        %s803 = smul.addr %s802, 2
        %s804 = smul.addr %s803, 4
        %s805 = scalar_lea.vmem %s9, %s804
      $region68: #{predictor_forward.1} parent=63 // pred_fallthru
        _
    $region64: #{predictor_forward.1} parent=5 // pred_fallthru
      _
  $region6: #{predictor_forward.1} parent=0 // loop_footer
    %s19 = sadd.s32 1, %s15
  $region7: #{predictor_forward.1} parent=0 // loop_footer_branch
    %14 = sbr.rel target = $region3
  $region8: #{predictor_forward.1} parent=0 // loop_exit
    _

</llo_original>
